<compile_context>
chip_gen: v6e
topology: v6e:2x2x1
jax: 0.10.0
libtpu: 0.0.40
codegen_flags: <defaults>
</compile_context>

<pallas_src>
import jax
import jax.numpy as jnp
from jax.experimental import pallas as pl
from jax.experimental.pallas import tpu as pltpu


def _identity_copy_kernel(z_ref, o_ref, sem):
    # One HBM->HBM DMA of the whole array: no VMEM staging, no vreg traffic,
    # bounded only by HBM bandwidth.
    cp = pltpu.make_async_copy(z_ref, o_ref, sem)
    cp.start()
    cp.wait()


def _identity_copy(z):
    """Materialize a fresh copy of `z` with a single HBM->HBM DMA."""
    orig_shape = z.shape
    z2 = z.reshape(1, 1) if z.ndim == 0 else z
    nbytes = z2.size * z2.dtype.itemsize
    out = pl.pallas_call(
        _identity_copy_kernel,
        out_shape=jax.ShapeDtypeStruct(z2.shape, z2.dtype),
        in_specs=[pl.BlockSpec(memory_space=pl.ANY)],   # raw HBM ref, no auto-DMA
        out_specs=pl.BlockSpec(memory_space=pl.ANY),    # raw HBM ref, no auto-DMA
        scratch_shapes=[pltpu.SemaphoreType.DMA(())],
        cost_estimate=pl.CostEstimate(
            flops=0, transcendentals=0, bytes_accessed=2 * nbytes),
    )(z2)
    return out.reshape(orig_shape)


def identity_forward(z, *args, materialize=False):
    """Pallas equivalent of Identity.forward(z, *args) -> z (extra args ignored).

    Default path is a true identity: no pallas_call, no data movement (the
    dominant optimization for this module).  Set materialize=True only if a
    physically distinct output buffer is required; that path is one HBM->HBM
    DMA with no VMEM usage.
    """
    del args  # the module ignores everything after z
    if not materialize:
        return z
    return _identity_copy(z)


if __name__ == "__main__":
    key = jax.random.PRNGKey(0)
    k_z, k_s, k_big, k_vec = jax.random.split(key, 4)

    # Small feature map wrapped by Identity, plus an extra positional arg that
    # forward(z, *args) ignores.
    z = jax.random.normal(k_z, (2, 4, 16, 16), jnp.float32)
    s = jax.random.normal(k_s, (2, 8), jnp.float32)  # ignored, as in the module

    # Default (zero-copy) path: exact module semantics, zero HBM traffic.
    out = identity_forward(z, s)
    jax.block_until_ready(out)
    assert out.shape == z.shape and out.dtype == z.dtype
    assert jnp.array_equal(out, z)

    # Materialized path: exercises the Pallas HBM->HBM DMA kernel once.
    out_copy = identity_forward(z, s, materialize=True)
    jax.block_until_ready(out_copy)
    assert out_copy.shape == z.shape and out_copy.dtype == z.dtype
    assert jnp.array_equal(out_copy, z)

    # Different dtype / lane-aligned 2-D input: still a single DMA descriptor.
    z_big = jax.random.normal(k_big, (2048, 256), jnp.float32).astype(jnp.bfloat16)
    out_big = identity_forward(z_big, materialize=True)
    jax.block_until_ready(out_big)
    assert out_big.shape == z_big.shape and out_big.dtype == z_big.dtype
    assert jnp.array_equal(out_big, z_big)

    # Large 1-D input: previously a VMEM hazard (single untiled block), now just
    # another HBM->HBM DMA with no VMEM footprint.
    z_vec = jax.random.normal(k_vec, (1 << 16,), jnp.float32)
    out_vec = identity_forward(z_vec, materialize=True)
    jax.block_until_ready(out_vec)
    assert out_vec.shape == z_vec.shape and out_vec.dtype == z_vec.dtype
    assert jnp.array_equal(out_vec, z_vec)

    print("KERNEL_OK")
</pallas_src>

<mosaic_0001>
module attributes {stable_mosaic.version = 11 : i64} {
  func.func @_identity_copy_kernel(%arg0: memref<2x4x16x16xf32, #tpu.memory_space<any>>, %arg1: memref<2x4x16x16xf32, #tpu.memory_space<any>>, %arg2: memref<!tpu.dma_semaphore, #tpu.memory_space<semaphore_mem>>) attributes {dimension_semantics = [], scalar_prefetch = 0 : i64, scratch_operands = 1 : i64, tpu.core_type = #tpu.core_type<tc>} {
    tpu.enqueue_dma source(%arg0 : memref<2x4x16x16xf32, #tpu.memory_space<any>>) target(%arg1 : memref<2x4x16x16xf32, #tpu.memory_space<any>>) target_semaphore(%arg2 : memref<!tpu.dma_semaphore, #tpu.memory_space<semaphore_mem>>)
    tpu.wait_dma2 semaphore(%arg2 : memref<!tpu.dma_semaphore, #tpu.memory_space<semaphore_mem>>) src(%arg0 : memref<2x4x16x16xf32, #tpu.memory_space<any>>) dst(%arg1 : memref<2x4x16x16xf32, #tpu.memory_space<any>>)
    return
  }
}

</mosaic_0001>

<llo_original>
// kernel: tpu_custom_call.1
$region0: #{tpu_custom_call.1}
  #allocation0 [shape = 'u32[]', space=smem, size = 0x4, offset = 0x4, fixed_abs, tag = 'smem constant byte address 0x4 - core index']
  #allocation1 [shape = 'u32[144,128]{1,0:T(1,128)}', space=vmem, size = 0x12000, scoped, tag = 'internal scratch']
  #allocation2 [shape = 's32[1]{0}', space=sflag, size = 0x4, scoped, tag = 'scratch operand']
  #allocation3 [shape = 's32[]', space=sflag, size = 0x4, offset = 0, fixed_abs, tag = 'sflag constant byte address 0x0 - dummy sync flag']
  #allocation4 [shape = 'u32[0]{0}', space=smem, size = 0, offset = 0, fixed_abs, tag = 'smem constant byte address 0x0 - null']
  %s0 = inlined_call_operand.hbm [shape: f32[2,4,16,16], index: 0, kind: input, shape index: {}]
  %s1 = inlined_call_operand.hbm [shape: f32[2,4,16,16], index: 1, kind: output, shape index: {}]
  %s2 = sld [smem:[#allocation0]]
  $region2: #{tpu_custom_call.1} parent=0
    _
  %s4 = ssub.s32 1, %s2
  %s5 = scalar_select 0, %s4, %s2
  %s7 = sshll.u32 1, 14
  %s8 = sxor.u32 4294967295, %s7
  %12 = dma.general %s0, 2048, %s1, [#allocation2], 131072, [#allocation4], 0, 0
  %s13 = smul.u32 2, 4
  %s14 = smul.u32 %s13, 16
  %s15 = smul.u32 %s14, 1
  %s16 = sshll.u32 %s15, 4
  %17 = dma.done [#allocation2], %s16
  %18 = vsyncmov [#allocation2]
  %s19 = vpop.sfrf %18
  %p20 = scmp.eq.s32.totalorder %s19, 0
  %p21 = pneg %p20
  %23 = shalt.err (%p21)

</llo_original>
